<compile_context>
chip_gen: v6e
topology: v6e:2x2x1
jax: 0.10.0
libtpu: 0.0.40
codegen_flags: <defaults>
</compile_context>

<pallas_src>
import functools

import jax
import jax.numpy as jnp
from jax import lax
from jax.experimental import pallas as pl
from jax.experimental.pallas import tpu as pltpu

EPS = 1e-5


def mlp_kernel(x_ref, w_ref, vec_ref, o_ref, *, n_valid):
    """Fused forward pass.

    x_ref  : (bp, P)    bf16
    w_ref  : (4, P, P)  bf16   stacked w1..w4 (zero padded)
    vec_ref: (16, P)    f32    rows = b1,g1,be1, b2,g2,be2, b3,g3,be3, b4, zeros
    o_ref  : (bp, P)    f32
    """
    bp = x_ref.shape[0]
    inv_n = 1.0 / float(n_valid)

    vecs = vec_ref[...]  # single (16, P) f32 load; rows sliced statically below

    if n_valid == bp:
        row_mask = None
    else:
        # 1.0 for real rows, 0.0 for padded rows (padding must not enter BN stats).
        row_mask = (lax.broadcasted_iota(jnp.int32, (bp, 1), 0) < n_valid
                    ).astype(jnp.float32)

    def linear_relu_bn(h_bf16, layer):
        w = w_ref[layer]                     # (P, P) bf16
        b = vecs[3 * layer]                  # (P,)
        g = vecs[3 * layer + 1]
        be = vecs[3 * layer + 2]
        # Linear (bf16 MXU operands, f32 accumulate) + bias.
        z = jnp.dot(h_bf16, w, preferred_element_type=jnp.float32) + b
        # ReLU (VPU, f32).
        a = jnp.maximum(z, 0.0)
        # One-pass batch statistics over the *real* rows only.
        a_m = a if row_mask is None else a * row_mask
        s = jnp.sum(a_m, axis=0, keepdims=True)
        ss = jnp.sum(a_m * a_m, axis=0, keepdims=True)
        mean = s * inv_n
        var = jnp.maximum(ss * inv_n - mean * mean, 0.0)   # biased (training-mode) var
        # Fused affine epilogue: a * scale + shift (rsqrt -> EUP).
        scale = g * lax.rsqrt(var + EPS)
        shift = be - mean * scale
        return a * scale + shift

    h = linear_relu_bn(x_ref[...], 0)
    h = linear_relu_bn(h.astype(jnp.bfloat16), 1)
    h = linear_relu_bn(h.astype(jnp.bfloat16), 2)
    # Output layer (no activation / BN), lane-dense f32 store.
    o_ref[...] = (jnp.dot(h.astype(jnp.bfloat16), w_ref[3],
                          preferred_element_type=jnp.float32) + vecs[9])


def _round_up(v, m):
    return ((v + m - 1) // m) * m


def _pad2(a, rows, cols, dtype):
    a = jnp.asarray(a, jnp.float32)
    return jnp.pad(a, ((0, rows - a.shape[0]), (0, cols - a.shape[1]))).astype(dtype)


def prepare_params(params):
    """One-time packing: pad + cast weights/vectors into two coalesced slabs."""
    input_dim = params["w1"].shape[0]
    hidden_dim = params["w1"].shape[1]
    output_dim = params["w4"].shape[1]
    P = _round_up(max(input_dim, hidden_dim, output_dim), 128)

    w_slab = jnp.stack([
        _pad2(params["w1"], P, P, jnp.bfloat16),
        _pad2(params["w2"], P, P, jnp.bfloat16),
        _pad2(params["w3"], P, P, jnp.bfloat16),
        _pad2(params["w4"], P, P, jnp.bfloat16),
    ])                                                  # (4, P, P) bf16

    rows = [params["b1"], params["g1"], params["beta1"],
            params["b2"], params["g2"], params["beta2"],
            params["b3"], params["g3"], params["beta3"],
            params["b4"]]
    vec_rows = [_pad2(r, 1, P, jnp.float32) for r in rows]
    vec_rows.append(jnp.zeros((16 - len(vec_rows), P), jnp.float32))
    vec_slab = jnp.concatenate(vec_rows, axis=0)        # (16, P) f32

    return w_slab, vec_slab, output_dim


@functools.partial(jax.jit, static_argnames=("output_dim",))
def custom_mlp_forward(x, w_slab, vec_slab, *, output_dim):
    """x: (batch, input_dim) f32. w_slab/vec_slab from prepare_params()."""
    batch, input_dim = x.shape
    P = int(w_slab.shape[-1])
    bp = _round_up(batch, 16)                           # bf16 sublane packing

    xp = jnp.pad(x, ((0, bp - batch), (0, P - input_dim))).astype(jnp.bfloat16)

    in_bytes = (xp.size * 2) + (w_slab.size * 2) + (vec_slab.size * 4)
    out_bytes = bp * P * 4
    # Gridless, single-buffered: 1x(in+out) + activation slack, clamped to 32 MiB (v7x).
    vmem_budget = min(32 << 20, max(4 << 20, in_bytes + out_bytes + (4 << 20)))
    cost = pl.CostEstimate(flops=2 * bp * P * P * 4,
                           transcendentals=3 * P,
                           bytes_accessed=in_bytes + out_bytes)

    vmem = pl.BlockSpec(memory_space=pltpu.MemorySpace.VMEM)
    out_padded = pl.pallas_call(
        functools.partial(mlp_kernel, n_valid=batch),
        out_shape=jax.ShapeDtypeStruct((bp, P), jnp.float32),
        in_specs=[vmem, vmem, vmem],
        out_specs=vmem,
        cost_estimate=cost,
        compiler_params=pltpu.CompilerParams(vmem_limit_bytes=vmem_budget),
    )(xp, w_slab, vec_slab)

    return out_padded[:batch, :output_dim]


def reference_forward(x, p):
    """Plain-JAX reference mirroring the kernel numerics (bf16 MXU operands, f32 BN)."""
    def dot_bf16(a, w):
        return jnp.dot(a.astype(jnp.bfloat16), w.astype(jnp.bfloat16),
                       preferred_element_type=jnp.float32)

    def block(h, w, b, g, be):
        a = jnp.maximum(dot_bf16(h, w) + b, 0.0)
        n = a.shape[0]
        mean = jnp.sum(a, axis=0, keepdims=True) / n
        var = jnp.maximum(jnp.sum(a * a, axis=0, keepdims=True) / n - mean * mean, 0.0)
        scale = g * lax.rsqrt(var + EPS)
        return a * scale + (be - mean * scale)

    h = block(x, p["w1"], p["b1"], p["g1"], p["beta1"])
    h = block(h, p["w2"], p["b2"], p["g2"], p["beta2"])
    h = block(h, p["w3"], p["b3"], p["g3"], p["beta3"])
    return dot_bf16(h, p["w4"]) + p["b4"]


def init_params(key, input_dim, hidden_dim, output_dim):
    ks = jax.random.split(key, 8)

    def lin(kw, kb, fan_in, fan_out):
        bound = 1.0 / jnp.sqrt(fan_in)
        w = jax.random.uniform(kw, (fan_in, fan_out), jnp.float32, -bound, bound)
        b = jax.random.uniform(kb, (1, fan_out), jnp.float32, -bound, bound)
        return w, b

    w1, b1 = lin(ks[0], ks[1], input_dim, hidden_dim)
    w2, b2 = lin(ks[2], ks[3], hidden_dim, hidden_dim)
    w3, b3 = lin(ks[4], ks[5], hidden_dim, hidden_dim)
    w4, b4 = lin(ks[6], ks[7], hidden_dim, output_dim)

    ones = jnp.ones((1, hidden_dim), jnp.float32)
    zeros = jnp.zeros((1, hidden_dim), jnp.float32)
    return dict(
        w1=w1, b1=b1, g1=ones, beta1=zeros,
        w2=w2, b2=b2, g2=ones, beta2=zeros,
        w3=w3, b3=b3, g3=ones, beta3=zeros,
        w4=w4, b4=b4,
    )


if __name__ == "__main__":
    key = jax.random.PRNGKey(0)
    kx, kp = jax.random.split(key)

    batch, input_dim, hidden_dim, output_dim = 8, 16, 32, 4
    x = jax.random.normal(kx, (batch, input_dim), jnp.float32)
    params = init_params(kp, input_dim, hidden_dim, output_dim)

    # One-time parameter packing (hoisted out of the per-call path).
    w_slab, vec_slab, out_dim = prepare_params(params)

    out = custom_mlp_forward(x, w_slab, vec_slab, output_dim=out_dim)
    out = jax.block_until_ready(out)

    ref = reference_forward(x, params)
    assert out.shape == (batch, output_dim)
    assert jnp.allclose(out, ref, atol=1e-2, rtol=1e-2), "mismatch vs reference"

    print("KERNEL_OK")
</pallas_src>

<mosaic_0001>
module attributes {stable_mosaic.version = 11 : i64} {
  func.func @mlp_kernel(%arg0: memref<16x128xbf16, #tpu.memory_space<vmem>>, %arg1: memref<4x128x128xbf16, #tpu.memory_space<vmem>>, %arg2: memref<16x128xf32, #tpu.memory_space<vmem>>, %arg3: memref<16x128xf32, #tpu.memory_space<vmem>>) attributes {dimension_semantics = [], scalar_prefetch = 0 : i64, scratch_operands = 0 : i64, tpu.core_type = #tpu.core_type<tc>} {
    %c0 = arith.constant 0 : index
    %c0_0 = arith.constant 0 : index
    %0 = vector.load %arg2[%c0, %c0_0] : memref<16x128xf32, #tpu.memory_space<vmem>>, vector<16x128xf32>
    %1 = tpu.iota {dimensions = array<i32: 0>} : vector<16x1xi32>
    %c8_i32 = arith.constant 8 : i32
    %2 = vector.broadcast %c8_i32 : i32 to vector<16x1xi32>
    %3 = arith.cmpi slt, %1, %2 : vector<16x1xi32>
    %4 = arith.extui %3 : vector<16x1xi1> to vector<16x1xi32>
    %5 = arith.sitofp %4 : vector<16x1xi32> to vector<16x1xf32>
    %c0_1 = arith.constant 0 : index
    %c0_2 = arith.constant 0 : index
    %6 = vector.load %arg0[%c0_1, %c0_2] : memref<16x128xbf16, #tpu.memory_space<vmem>>, vector<16x128xbf16>
    %c0_3 = arith.constant 0 : index
    %c0_4 = arith.constant 0 : index
    %c0_5 = arith.constant 0 : index
    %7 = vector.load %arg1[%c0_3, %c0_4, %c0_5] : memref<4x128x128xbf16, #tpu.memory_space<vmem>>, vector<1x128x128xbf16>
    %8 = vector.shape_cast %7 : vector<1x128x128xbf16> to vector<128x128xbf16>
    %9 = vector.extract_strided_slice %0 {offsets = [0, 0], sizes = [1, 128], strides = [1, 1]} : vector<16x128xf32> to vector<1x128xf32>
    %10 = vector.shape_cast %9 : vector<1x128xf32> to vector<128xf32>
    %11 = vector.extract_strided_slice %0 {offsets = [1, 0], sizes = [1, 128], strides = [1, 1]} : vector<16x128xf32> to vector<1x128xf32>
    %12 = vector.shape_cast %11 : vector<1x128xf32> to vector<128xf32>
    %13 = vector.extract_strided_slice %0 {offsets = [2, 0], sizes = [1, 128], strides = [1, 1]} : vector<16x128xf32> to vector<1x128xf32>
    %14 = vector.shape_cast %13 : vector<1x128xf32> to vector<128xf32>
    %cst = arith.constant dense<0.000000e+00> : vector<16x128xf32>
    %15 = tpu.matmul %6, %8, %cst {dimension_numbers = #tpu.dot_dimension_numbers<[1], [0], [0], [1], [0, 0, 1, 1], [], []>} : vector<16x128xbf16>, vector<128x128xbf16>, vector<16x128xf32> -> vector<16x128xf32>
    %16 = vector.shape_cast %10 : vector<128xf32> to vector<1x128xf32>
    %17 = vector.broadcast %16 : vector<1x128xf32> to vector<16x128xf32>
    %18 = arith.addf %15, %17 : vector<16x128xf32>
    %cst_6 = arith.constant 0.000000e+00 : f32
    %19 = vector.broadcast %cst_6 : f32 to vector<16x128xf32>
    %20 = arith.maximumf %18, %19 : vector<16x128xf32>
    %21 = vector.broadcast %5 : vector<16x1xf32> to vector<16x128xf32>
    %22 = arith.mulf %20, %21 : vector<16x128xf32>
    %cst_7 = arith.constant dense<0.000000e+00> : vector<128xf32>
    %23 = vector.multi_reduction <add>, %22, %cst_7 [0] : vector<16x128xf32> to vector<128xf32>
    %24 = vector.shape_cast %23 : vector<128xf32> to vector<1x128xf32>
    %25 = arith.mulf %22, %22 : vector<16x128xf32>
    %cst_8 = arith.constant dense<0.000000e+00> : vector<128xf32>
    %26 = vector.multi_reduction <add>, %25, %cst_8 [0] : vector<16x128xf32> to vector<128xf32>
    %27 = vector.shape_cast %26 : vector<128xf32> to vector<1x128xf32>
    %cst_9 = arith.constant 1.250000e-01 : f32
    %28 = vector.broadcast %cst_9 : f32 to vector<1x128xf32>
    %29 = arith.mulf %24, %28 : vector<1x128xf32>
    %cst_10 = arith.constant 1.250000e-01 : f32
    %30 = vector.broadcast %cst_10 : f32 to vector<1x128xf32>
    %31 = arith.mulf %27, %30 : vector<1x128xf32>
    %32 = arith.mulf %29, %29 : vector<1x128xf32>
    %33 = arith.subf %31, %32 : vector<1x128xf32>
    %cst_11 = arith.constant 0.000000e+00 : f32
    %34 = vector.broadcast %cst_11 : f32 to vector<1x128xf32>
    %35 = arith.maximumf %33, %34 : vector<1x128xf32>
    %cst_12 = arith.constant 9.99999974E-6 : f32
    %36 = vector.broadcast %cst_12 : f32 to vector<1x128xf32>
    %37 = arith.addf %35, %36 : vector<1x128xf32>
    %38 = math.rsqrt %37 : vector<1x128xf32>
    %39 = vector.shape_cast %12 : vector<128xf32> to vector<1x128xf32>
    %40 = arith.mulf %39, %38 : vector<1x128xf32>
    %41 = arith.mulf %29, %40 : vector<1x128xf32>
    %42 = vector.shape_cast %14 : vector<128xf32> to vector<1x128xf32>
    %43 = arith.subf %42, %41 : vector<1x128xf32>
    %44 = vector.broadcast %40 : vector<1x128xf32> to vector<16x128xf32>
    %45 = arith.mulf %20, %44 : vector<16x128xf32>
    %46 = vector.broadcast %43 : vector<1x128xf32> to vector<16x128xf32>
    %47 = arith.addf %45, %46 : vector<16x128xf32>
    %48 = arith.truncf %47 : vector<16x128xf32> to vector<16x128xbf16>
    %c1 = arith.constant 1 : index
    %c0_13 = arith.constant 0 : index
    %c0_14 = arith.constant 0 : index
    %49 = vector.load %arg1[%c1, %c0_13, %c0_14] : memref<4x128x128xbf16, #tpu.memory_space<vmem>>, vector<1x128x128xbf16>
    %50 = vector.shape_cast %49 : vector<1x128x128xbf16> to vector<128x128xbf16>
    %51 = vector.extract_strided_slice %0 {offsets = [3, 0], sizes = [1, 128], strides = [1, 1]} : vector<16x128xf32> to vector<1x128xf32>
    %52 = vector.shape_cast %51 : vector<1x128xf32> to vector<128xf32>
    %53 = vector.extract_strided_slice %0 {offsets = [4, 0], sizes = [1, 128], strides = [1, 1]} : vector<16x128xf32> to vector<1x128xf32>
    %54 = vector.shape_cast %53 : vector<1x128xf32> to vector<128xf32>
    %55 = vector.extract_strided_slice %0 {offsets = [5, 0], sizes = [1, 128], strides = [1, 1]} : vector<16x128xf32> to vector<1x128xf32>
    %56 = vector.shape_cast %55 : vector<1x128xf32> to vector<128xf32>
    %cst_15 = arith.constant dense<0.000000e+00> : vector<16x128xf32>
    %57 = tpu.matmul %48, %50, %cst_15 {dimension_numbers = #tpu.dot_dimension_numbers<[1], [0], [0], [1], [0, 0, 1, 1], [], []>} : vector<16x128xbf16>, vector<128x128xbf16>, vector<16x128xf32> -> vector<16x128xf32>
    %58 = vector.shape_cast %52 : vector<128xf32> to vector<1x128xf32>
    %59 = vector.broadcast %58 : vector<1x128xf32> to vector<16x128xf32>
    %60 = arith.addf %57, %59 : vector<16x128xf32>
    %cst_16 = arith.constant 0.000000e+00 : f32
    %61 = vector.broadcast %cst_16 : f32 to vector<16x128xf32>
    %62 = arith.maximumf %60, %61 : vector<16x128xf32>
    %63 = vector.broadcast %5 : vector<16x1xf32> to vector<16x128xf32>
    %64 = arith.mulf %62, %63 : vector<16x128xf32>
    %cst_17 = arith.constant dense<0.000000e+00> : vector<128xf32>
    %65 = vector.multi_reduction <add>, %64, %cst_17 [0] : vector<16x128xf32> to vector<128xf32>
    %66 = vector.shape_cast %65 : vector<128xf32> to vector<1x128xf32>
    %67 = arith.mulf %64, %64 : vector<16x128xf32>
    %cst_18 = arith.constant dense<0.000000e+00> : vector<128xf32>
    %68 = vector.multi_reduction <add>, %67, %cst_18 [0] : vector<16x128xf32> to vector<128xf32>
    %69 = vector.shape_cast %68 : vector<128xf32> to vector<1x128xf32>
    %cst_19 = arith.constant 1.250000e-01 : f32
    %70 = vector.broadcast %cst_19 : f32 to vector<1x128xf32>
    %71 = arith.mulf %66, %70 : vector<1x128xf32>
    %cst_20 = arith.constant 1.250000e-01 : f32
    %72 = vector.broadcast %cst_20 : f32 to vector<1x128xf32>
    %73 = arith.mulf %69, %72 : vector<1x128xf32>
    %74 = arith.mulf %71, %71 : vector<1x128xf32>
    %75 = arith.subf %73, %74 : vector<1x128xf32>
    %cst_21 = arith.constant 0.000000e+00 : f32
    %76 = vector.broadcast %cst_21 : f32 to vector<1x128xf32>
    %77 = arith.maximumf %75, %76 : vector<1x128xf32>
    %cst_22 = arith.constant 9.99999974E-6 : f32
    %78 = vector.broadcast %cst_22 : f32 to vector<1x128xf32>
    %79 = arith.addf %77, %78 : vector<1x128xf32>
    %80 = math.rsqrt %79 : vector<1x128xf32>
    %81 = vector.shape_cast %54 : vector<128xf32> to vector<1x128xf32>
    %82 = arith.mulf %81, %80 : vector<1x128xf32>
    %83 = arith.mulf %71, %82 : vector<1x128xf32>
    %84 = vector.shape_cast %56 : vector<128xf32> to vector<1x128xf32>
    %85 = arith.subf %84, %83 : vector<1x128xf32>
    %86 = vector.broadcast %82 : vector<1x128xf32> to vector<16x128xf32>
    %87 = arith.mulf %62, %86 : vector<16x128xf32>
    %88 = vector.broadcast %85 : vector<1x128xf32> to vector<16x128xf32>
    %89 = arith.addf %87, %88 : vector<16x128xf32>
    %90 = arith.truncf %89 : vector<16x128xf32> to vector<16x128xbf16>
    %c2 = arith.constant 2 : index
    %c0_23 = arith.constant 0 : index
    %c0_24 = arith.constant 0 : index
    %91 = vector.load %arg1[%c2, %c0_23, %c0_24] : memref<4x128x128xbf16, #tpu.memory_space<vmem>>, vector<1x128x128xbf16>
    %92 = vector.shape_cast %91 : vector<1x128x128xbf16> to vector<128x128xbf16>
    %93 = vector.extract_strided_slice %0 {offsets = [6, 0], sizes = [1, 128], strides = [1, 1]} : vector<16x128xf32> to vector<1x128xf32>
    %94 = vector.shape_cast %93 : vector<1x128xf32> to vector<128xf32>
    %95 = vector.extract_strided_slice %0 {offsets = [7, 0], sizes = [1, 128], strides = [1, 1]} : vector<16x128xf32> to vector<1x128xf32>
    %96 = vector.shape_cast %95 : vector<1x128xf32> to vector<128xf32>
    %97 = vector.extract_strided_slice %0 {offsets = [8, 0], sizes = [1, 128], strides = [1, 1]} : vector<16x128xf32> to vector<1x128xf32>
    %98 = vector.shape_cast %97 : vector<1x128xf32> to vector<128xf32>
    %cst_25 = arith.constant dense<0.000000e+00> : vector<16x128xf32>
    %99 = tpu.matmul %90, %92, %cst_25 {dimension_numbers = #tpu.dot_dimension_numbers<[1], [0], [0], [1], [0, 0, 1, 1], [], []>} : vector<16x128xbf16>, vector<128x128xbf16>, vector<16x128xf32> -> vector<16x128xf32>
    %100 = vector.shape_cast %94 : vector<128xf32> to vector<1x128xf32>
    %101 = vector.broadcast %100 : vector<1x128xf32> to vector<16x128xf32>
    %102 = arith.addf %99, %101 : vector<16x128xf32>
    %cst_26 = arith.constant 0.000000e+00 : f32
    %103 = vector.broadcast %cst_26 : f32 to vector<16x128xf32>
    %104 = arith.maximumf %102, %103 : vector<16x128xf32>
    %105 = vector.broadcast %5 : vector<16x1xf32> to vector<16x128xf32>
    %106 = arith.mulf %104, %105 : vector<16x128xf32>
    %cst_27 = arith.constant dense<0.000000e+00> : vector<128xf32>
    %107 = vector.multi_reduction <add>, %106, %cst_27 [0] : vector<16x128xf32> to vector<128xf32>
    %108 = vector.shape_cast %107 : vector<128xf32> to vector<1x128xf32>
    %109 = arith.mulf %106, %106 : vector<16x128xf32>
    %cst_28 = arith.constant dense<0.000000e+00> : vector<128xf32>
    %110 = vector.multi_reduction <add>, %109, %cst_28 [0] : vector<16x128xf32> to vector<128xf32>
    %111 = vector.shape_cast %110 : vector<128xf32> to vector<1x128xf32>
    %cst_29 = arith.constant 1.250000e-01 : f32
    %112 = vector.broadcast %cst_29 : f32 to vector<1x128xf32>
    %113 = arith.mulf %108, %112 : vector<1x128xf32>
    %cst_30 = arith.constant 1.250000e-01 : f32
    %114 = vector.broadcast %cst_30 : f32 to vector<1x128xf32>
    %115 = arith.mulf %111, %114 : vector<1x128xf32>
    %116 = arith.mulf %113, %113 : vector<1x128xf32>
    %117 = arith.subf %115, %116 : vector<1x128xf32>
    %cst_31 = arith.constant 0.000000e+00 : f32
    %118 = vector.broadcast %cst_31 : f32 to vector<1x128xf32>
    %119 = arith.maximumf %117, %118 : vector<1x128xf32>
    %cst_32 = arith.constant 9.99999974E-6 : f32
    %120 = vector.broadcast %cst_32 : f32 to vector<1x128xf32>
    %121 = arith.addf %119, %120 : vector<1x128xf32>
    %122 = math.rsqrt %121 : vector<1x128xf32>
    %123 = vector.shape_cast %96 : vector<128xf32> to vector<1x128xf32>
    %124 = arith.mulf %123, %122 : vector<1x128xf32>
    %125 = arith.mulf %113, %124 : vector<1x128xf32>
    %126 = vector.shape_cast %98 : vector<128xf32> to vector<1x128xf32>
    %127 = arith.subf %126, %125 : vector<1x128xf32>
    %128 = vector.broadcast %124 : vector<1x128xf32> to vector<16x128xf32>
    %129 = arith.mulf %104, %128 : vector<16x128xf32>
    %130 = vector.broadcast %127 : vector<1x128xf32> to vector<16x128xf32>
    %131 = arith.addf %129, %130 : vector<16x128xf32>
    %132 = arith.truncf %131 : vector<16x128xf32> to vector<16x128xbf16>
    %c3 = arith.constant 3 : index
    %c0_33 = arith.constant 0 : index
    %c0_34 = arith.constant 0 : index
    %133 = vector.load %arg1[%c3, %c0_33, %c0_34] : memref<4x128x128xbf16, #tpu.memory_space<vmem>>, vector<1x128x128xbf16>
    %134 = vector.shape_cast %133 : vector<1x128x128xbf16> to vector<128x128xbf16>
    %cst_35 = arith.constant dense<0.000000e+00> : vector<16x128xf32>
    %135 = tpu.matmul %132, %134, %cst_35 {dimension_numbers = #tpu.dot_dimension_numbers<[1], [0], [0], [1], [0, 0, 1, 1], [], []>} : vector<16x128xbf16>, vector<128x128xbf16>, vector<16x128xf32> -> vector<16x128xf32>
    %136 = vector.extract_strided_slice %0 {offsets = [9, 0], sizes = [1, 128], strides = [1, 1]} : vector<16x128xf32> to vector<1x128xf32>
    %137 = vector.shape_cast %136 : vector<1x128xf32> to vector<128xf32>
    %138 = vector.shape_cast %137 : vector<128xf32> to vector<1x128xf32>
    %139 = vector.broadcast %138 : vector<1x128xf32> to vector<16x128xf32>
    %140 = arith.addf %135, %139 : vector<16x128xf32>
    %c0_36 = arith.constant 0 : index
    %c0_37 = arith.constant 0 : index
    %141 = vector.load %arg3[%c0_36, %c0_37] : memref<16x128xf32, #tpu.memory_space<vmem>>, vector<16x128xf32>
    tpu.vector_store %arg3[%c0_36, %c0_37], %140 {strides = array<i32>} : memref<16x128xf32, #tpu.memory_space<vmem>>, vector<16x128xf32>,
    return
  }
}

</mosaic_0001>

<llo_original>
// kernel: custom_mlp_forward.1
$region0: #{custom_mlp_forward.1}
  #allocation0 [shape = 'u32[]', space=smem, size = 0x4, offset = 0x4, fixed_abs, tag = 'smem constant byte address 0x4 - core index']
  #allocation1 [shape = 'u32[144,128]{1,0:T(1,128)}', space=vmem, size = 0x12000, scoped, tag = 'internal scratch']
  %s0 = inlined_call_operand.vmem [shape: bf16[16,128], index: 0, kind: input, shape index: {}]
  %s1 = inlined_call_operand.hbm [shape: bf16[4,128,128], index: 1, kind: input, shape index: {}]
  %s2 = inlined_call_operand.vmem [shape: f32[16,128], index: 2, kind: input, shape index: {}]
  %s3 = inlined_call_operand.vmem [shape: f32[16,128], index: 3, kind: output, shape index: {}]
  %s4 = sld [smem:[#allocation0]]
  $region26: #{custom_mlp_forward.1} parent=0
    _
  %s6 = ssub.s32 1, %s4
  %s7 = scalar_select 0, %s6, %s4
  $region1: #{custom_mlp_forward.1} parent=0
    #allocation2 [shape = 'u8[131072]{0}', space=vmem, size = 0x20000, scoped, tag = 'input window, operand 1, single buffered']
    #allocation3 [shape = 's32[1]{0}', space=sflag, size = 0x4, scoped, tag = 'scoped memory for custom_mlp_forward.1']
    %8 = vsyncpa [#allocation3], 0
    // Predicated region
    $region2: #{custom_mlp_forward.1} parent=1 // pred_check
      _
    $region3: #{custom_mlp_forward.1} parent=1 // pred_check_branch
      %10 = sbr.rel (0) target = $region5
    $region4: #{custom_mlp_forward.1} parent=1 // pred_region
      _
    $region5: #{custom_mlp_forward.1} parent=1 // pred_fallthru
      _
    // Predicated region
    $region6: #{custom_mlp_forward.1} parent=1 // pred_check
      _
    $region7: #{custom_mlp_forward.1} parent=1 // pred_check_branch
      %12 = sbr.rel (0) target = $region9
    $region8: #{custom_mlp_forward.1} parent=1 // pred_region
      %s14 = ssub.s32 4096, 4096
      %15 = vsyncadd [#allocation3], %s14
      %s16 = sshll.u32 [#allocation2], 4
      %s17 = int_to_ptr.vmem [resolvable:$true] %s16
      %22 = dma.hbm_to_vmem [thread:$0]  %s1, 4096, %s17, [#allocation3], 64, 64, 4
    $region9: #{custom_mlp_forward.1} parent=1 // pred_fallthru
      _
    // Predicated region
    $region10: #{custom_mlp_forward.1} parent=1 // pred_check
      _
    $region11: #{custom_mlp_forward.1} parent=1 // pred_check_branch
      %24 = sbr.rel (0) target = $region13
    $region12: #{custom_mlp_forward.1} parent=1 // pred_region
      _
    $region13: #{custom_mlp_forward.1} parent=1 // pred_fallthru
      _
    // Predicated region
    $region14: #{custom_mlp_forward.1} parent=1 // pred_check
      _
    $region15: #{custom_mlp_forward.1} parent=1 // pred_check_branch
      %26 = sbr.rel (0) target = $region17
    $region16: #{custom_mlp_forward.1} parent=1 // pred_region
      %27 = dma.done [#allocation3], 4096
    $region17: #{custom_mlp_forward.1} parent=1 // pred_fallthru
      _
    %v29 = vld [vmem:[%s2] sm:$0xff]
    %v30 = vld [vmem:[%s2 + $0x8] sm:$0xff]
    %v31 = vlaneseq
    %v32 = vshrl.u32 %v31, 7
    %v33 = vadd.s32 %v32, 8
    %vm34 = vcmp.lt.s32.totalorder %v32, 8
    %vm35 = vcmp.lt.s32.totalorder %v33, 8
    %v36 = vsel %vm34, 1, 0
    %v37 = vsel %vm35, 1, 0
    %v38 = vcvt.s32.f32 %v36
    %v39 = vcvt.s32.f32 %v37
    %v40 = vld [vmem:[%s0] sm:$0xf]
    %v41 = vld [vmem:[%s0 + $0x4] sm:$0xf]
    %v42 = vld [vmem:[#allocation2] sm:$0xf]
    %v43 = vld [vmem:[#allocation2 + $0x4] sm:$0xf]
    %v44 = vld [vmem:[#allocation2 + $0x8] sm:$0xf]
    %v45 = vld [vmem:[#allocation2 + $0xc] sm:$0xf]
    %v46 = vld [vmem:[#allocation2 + $0x10] sm:$0xf]
    %v47 = vld [vmem:[#allocation2 + $0x14] sm:$0xf]
    %v48 = vld [vmem:[#allocation2 + $0x18] sm:$0xf]
    %v49 = vld [vmem:[#allocation2 + $0x1c] sm:$0xf]
    %v50 = vld [vmem:[#allocation2 + $0x20] sm:$0xf]
    %v51 = vld [vmem:[#allocation2 + $0x24] sm:$0xf]
    %v52 = vld [vmem:[#allocation2 + $0x28] sm:$0xf]
    %v53 = vld [vmem:[#allocation2 + $0x2c] sm:$0xf]
    %v54 = vld [vmem:[#allocation2 + $0x30] sm:$0xf]
    %v55 = vld [vmem:[#allocation2 + $0x34] sm:$0xf]
    %v56 = vld [vmem:[#allocation2 + $0x38] sm:$0xf]
    %v57 = vld [vmem:[#allocation2 + $0x3c] sm:$0xf]
    %v58 = vlaneseq
    %v59 = vshrl.u32 %v58, 7
    %v60 = vsub.s32 0, %v59
    %v61 = vrot.slane %v29, %v60
    %v64 = vunpack.c.l.b16 %v40
    %v65 = vunpack.c.l.b16 %v41
    %v66 = vpack.c.b16 %v65, %v64
    %v84 = vunpack.c.l.b16 %v42
    %v85 = vunpack.c.l.b16 %v43
    %v86 = vunpack.c.l.b16 %v44
    %v87 = vunpack.c.l.b16 %v45
    %v88 = vunpack.c.l.b16 %v46
    %v89 = vunpack.c.l.b16 %v47
    %v90 = vunpack.c.l.b16 %v48
    %v91 = vunpack.c.l.b16 %v49
    %v92 = vunpack.c.l.b16 %v50
    %v93 = vunpack.c.l.b16 %v51
    %v94 = vunpack.c.l.b16 %v52
    %v95 = vunpack.c.l.b16 %v53
    %v96 = vunpack.c.l.b16 %v54
    %v97 = vunpack.c.l.b16 %v55
    %v98 = vunpack.c.l.b16 %v56
    %v99 = vunpack.c.l.b16 %v57
    %v100 = vpack.c.b16 %v85, %v84
    %v101 = vpack.c.b16 %v87, %v86
    %v102 = vpack.c.b16 %v89, %v88
    %v103 = vpack.c.b16 %v91, %v90
    %v104 = vpack.c.b16 %v93, %v92
    %v105 = vpack.c.b16 %v95, %v94
    %v106 = vpack.c.b16 %v97, %v96
    %v107 = vpack.c.b16 %v99, %v98
    %116 = vmatprep.subr.bf16.mxu0 0
    %117 = vmatpush1.bf16.msra.mxu0 %v107
    %118 = vmatprep.subr.bf16.mxu0 0
    %119 = vmatpush1.bf16.msra.mxu0 %v106
    %120 = vmatprep.subr.bf16.mxu0 0
    %121 = vmatpush1.bf16.msra.mxu0 %v105
    %122 = vmatprep.subr.bf16.mxu0 0
    %123 = vmatpush1.bf16.msra.mxu0 %v104
    %124 = vmatprep.subr.bf16.mxu0 0
    %125 = vmatpush1.bf16.msra.mxu0 %v103
    %126 = vmatprep.subr.bf16.mxu0 0
    %127 = vmatpush1.bf16.msra.mxu0 %v102
    %128 = vmatprep.subr.bf16.mxu0 0
    %129 = vmatpush1.bf16.msra.mxu0 %v101
    %130 = vmatprep.subr.bf16.mxu0 0
    %131 = vmatpush1.bf16.msra.mxu0 %v100
    %132 = vmatprep.subr.bf16.mxu0 0
    %133 = vmatpush2.bf16.msra.mxu0 0
    %134 = vmatprep.subr.bf16.mxu0 0
    %135 = vmatpush2.bf16.msra.mxu0 0
    %136 = vmatprep.subr.bf16.mxu0 0
    %137 = vmatpush2.bf16.msra.mxu0 0
    %138 = vmatprep.subr.bf16.mxu0 0
    %139 = vmatpush2.bf16.msra.mxu0 0
    %140 = vmatprep.subr.bf16.mxu0 0
    %141 = vmatpush2.bf16.msra.mxu0 0
    %142 = vmatprep.subr.bf16.mxu0 0
    %143 = vmatpush2.bf16.msra.mxu0 0
    %144 = vmatprep.subr.bf16.mxu0 0
    %145 = vmatpush2.bf16.msra.mxu0 0
    %146 = vmatprep.subr.bf16.mxu0 0
    %147 = vmatpush2.bf16.msra.mxu0 0
    %148 = vmatprep.mubr.bf16.mxu0 0
    %149 = vmatmul.mubr.bf16.gmra.mxu0 %v66
    %v150 = vpop.f32.mrf.mxu0
    %v151 = vadd.f32 %v61, %v150
    %v152 = vpop.f32.mrf.mxu0
    %v153 = vpop.f32.mrf.mxu0
    %v154 = vadd.f32 %v61, %v153
    %v155 = vpop.f32.mrf.mxu0
    %156 = vdwg.mxu0
    %v157 = vmax.f32 %v151, 0.0
    %v158 = vmax.f32 %v154, 0.0
    %v159 = vmul.f32 %v157, %v38
    %v160 = vmul.f32 %v158, %v39
    %v161 = vadd.f32 %v159, %v160
    %v162 = vrot.slane %v161, 4
    %v163 = vadd.f32 %v161, %v162
    %v164 = vrot.slane %v163, 2
    %v165 = vadd.f32 %v163, %v164
    %v166 = vrot.slane %v165, 1
    %v167 = vadd.f32 %v165, %v166
    %v168 = vmul.f32 %v159, %v159
    %v169 = vmul.f32 %v160, %v160
    %v170 = vadd.f32 %v168, %v169
    %v171 = vrot.slane %v170, 4
    %v172 = vadd.f32 %v170, %v171
    %v173 = vrot.slane %v172, 2
    %v174 = vadd.f32 %v172, %v173
    %v175 = vrot.slane %v174, 1
    %v176 = vadd.f32 %v174, %v175
    %v177 = vmul.f32 %v167, 0.125
    %v178 = vmul.f32 %v176, 0.125
    %v179 = vmul.f32 %v177, %v177
    %v180 = vsub.f32 %v178, %v179
    %v181 = vmax.f32 %v180, 0.0
    %v182 = vadd.f32 %v181, 1e-05
    %v183 = vrsqrt.pop %v182
    %v184 = vmul.f32 %v29, %v183
    %v185 = vmul.f32 %v177, %v184
    %v187 = vrot.slane %v185, 7
    %v189 = vsub.f32 %v29, %v187
    %v190 = vlaneseq
    %v191 = vshrl.u32 %v190, 7
    %v192 = vsub.s32 1, %v191
    %v193 = vrot.slane %v184, %v192
    %v194 = vmul.f32 %v157, %v193
    %v195 = vmul.f32 %v158, %v193
    %v196 = vlaneseq
    %v197 = vshrl.u32 %v196, 7
    %v198 = vsub.s32 2, %v197
    %v199 = vrot.slane %v189, %v198
    %v200 = vadd.f32 %v194, %v199
    %v201 = vadd.f32 %v195, %v199
    %v202 = vpack.c.bf16 %v201, %v200
    %s203 = scalar_lea.vmem [#allocation2], 64
    %v204 = vld [vmem:[%s203] sm:$0xf]
    %v205 = vld [vmem:[%s203 + $0x4] sm:$0xf]
    %v206 = vld [vmem:[%s203 + $0x8] sm:$0xf]
    %v207 = vld [vmem:[%s203 + $0xc] sm:$0xf]
    %v208 = vld [vmem:[%s203 + $0x10] sm:$0xf]
    %v209 = vld [vmem:[%s203 + $0x14] sm:$0xf]
    %v210 = vld [vmem:[%s203 + $0x18] sm:$0xf]
    %v211 = vld [vmem:[%s203 + $0x1c] sm:$0xf]
    %v212 = vld [vmem:[%s203 + $0x20] sm:$0xf]
    %v213 = vld [vmem:[%s203 + $0x24] sm:$0xf]
    %v214 = vld [vmem:[%s203 + $0x28] sm:$0xf]
    %v215 = vld [vmem:[%s203 + $0x2c] sm:$0xf]
    %v216 = vld [vmem:[%s203 + $0x30] sm:$0xf]
    %v217 = vld [vmem:[%s203 + $0x34] sm:$0xf]
    %v218 = vld [vmem:[%s203 + $0x38] sm:$0xf]
    %v219 = vld [vmem:[%s203 + $0x3c] sm:$0xf]
    %v220 = vlaneseq
    %v221 = vshrl.u32 %v220, 7
    %v222 = vsub.s32 3, %v221
    %v223 = vrot.slane %v29, %v222
    %v240 = vunpack.c.l.b16 %v204
    %v241 = vunpack.c.l.b16 %v205
    %v242 = vunpack.c.l.b16 %v206
    %v243 = vunpack.c.l.b16 %v207
    %v244 = vunpack.c.l.b16 %v208
    %v245 = vunpack.c.l.b16 %v209
    %v246 = vunpack.c.l.b16 %v210
    %v247 = vunpack.c.l.b16 %v211
    %v248 = vunpack.c.l.b16 %v212
    %v249 = vunpack.c.l.b16 %v213
    %v250 = vunpack.c.l.b16 %v214
    %v251 = vunpack.c.l.b16 %v215
    %v252 = vunpack.c.l.b16 %v216
    %v253 = vunpack.c.l.b16 %v217
    %v254 = vunpack.c.l.b16 %v218
    %v255 = vunpack.c.l.b16 %v219
    %v256 = vpack.c.b16 %v241, %v240
    %v257 = vpack.c.b16 %v243, %v242
    %v258 = vpack.c.b16 %v245, %v244
    %v259 = vpack.c.b16 %v247, %v246
    %v260 = vpack.c.b16 %v249, %v248
    %v261 = vpack.c.b16 %v251, %v250
    %v262 = vpack.c.b16 %v253, %v252
    %v263 = vpack.c.b16 %v255, %v254
    %272 = vmatprep.subr.bf16.mxu0 0
    %273 = vmatpush1.bf16.msra.mxu0 %v263
    %274 = vmatprep.subr.bf16.mxu0 0
    %275 = vmatpush1.bf16.msra.mxu0 %v262
    %276 = vmatprep.subr.bf16.mxu0 0
    %277 = vmatpush1.bf16.msra.mxu0 %v261
    %278 = vmatprep.subr.bf16.mxu0 0
    %279 = vmatpush1.bf16.msra.mxu0 %v260
    %280 = vmatprep.subr.bf16.mxu0 0
    %281 = vmatpush1.bf16.msra.mxu0 %v259
    %282 = vmatprep.subr.bf16.mxu0 0
    %283 = vmatpush1.bf16.msra.mxu0 %v258
    %284 = vmatprep.subr.bf16.mxu0 0
    %285 = vmatpush1.bf16.msra.mxu0 %v257
    %286 = vmatprep.subr.bf16.mxu0 0
    %287 = vmatpush1.bf16.msra.mxu0 %v256
    %288 = vmatprep.subr.bf16.mxu0 0
    %289 = vmatpush2.bf16.msra.mxu0 0
    %290 = vmatprep.subr.bf16.mxu0 0
    %291 = vmatpush2.bf16.msra.mxu0 0
    %292 = vmatprep.subr.bf16.mxu0 0
    %293 = vmatpush2.bf16.msra.mxu0 0
    %294 = vmatprep.subr.bf16.mxu0 0
    %295 = vmatpush2.bf16.msra.mxu0 0
    %296 = vmatprep.subr.bf16.mxu0 0
    %297 = vmatpush2.bf16.msra.mxu0 0
    %298 = vmatprep.subr.bf16.mxu0 0
    %299 = vmatpush2.bf16.msra.mxu0 0
    %300 = vmatprep.subr.bf16.mxu0 0
    %301 = vmatpush2.bf16.msra.mxu0 0
    %302 = vmatprep.subr.bf16.mxu0 0
    %303 = vmatpush2.bf16.msra.mxu0 0
    %304 = vmatprep.mubr.bf16.mxu0 0
    %305 = vmatmul.mubr.bf16.gmra.mxu0 %v202
    %v306 = vpop.f32.mrf.mxu0
    %v307 = vadd.f32 %v223, %v306
    %v308 = vpop.f32.mrf.mxu0
    %v309 = vpop.f32.mrf.mxu0
    %v310 = vadd.f32 %v223, %v309
    %v311 = vpop.f32.mrf.mxu0
    %312 = vdwg.mxu0
    %v313 = vmax.f32 %v307, 0.0
    %v314 = vmax.f32 %v310, 0.0
    %v315 = vmul.f32 %v313, %v38
    %v316 = vmul.f32 %v314, %v39
    %v317 = vadd.f32 %v315, %v316
    %v318 = vrot.slane %v317, 4
    %v319 = vadd.f32 %v317, %v318
    %v320 = vrot.slane %v319, 2
    %v321 = vadd.f32 %v319, %v320
    %v322 = vrot.slane %v321, 1
    %v323 = vadd.f32 %v321, %v322
    %v324 = vmul.f32 %v315, %v315
    %v325 = vmul.f32 %v316, %v316
    %v326 = vadd.f32 %v324, %v325
    %v327 = vrot.slane %v326, 4
    %v328 = vadd.f32 %v326, %v327
    %v329 = vrot.slane %v328, 2
    %v330 = vadd.f32 %v328, %v329
    %v331 = vrot.slane %v330, 1
    %v332 = vadd.f32 %v330, %v331
    %v333 = vmul.f32 %v323, 0.125
    %v334 = vmul.f32 %v332, 0.125
    %v335 = vmul.f32 %v333, %v333
    %v336 = vsub.f32 %v334, %v335
    %v337 = vmax.f32 %v336, 0.0
    %v338 = vadd.f32 %v337, 1e-05
    %v339 = vrsqrt.pop %v338
    %v340 = vmul.f32 %v29, %v339
    %v341 = vmul.f32 %v333, %v340
    %v343 = vrot.slane %v341, 7
    %v345 = vsub.f32 %v29, %v343
    %v346 = vlaneseq
    %v347 = vshrl.u32 %v346, 7
    %v348 = vsub.s32 4, %v347
    %v349 = vrot.slane %v340, %v348
    %v350 = vmul.f32 %v313, %v349
    %v351 = vmul.f32 %v314, %v349
    %v352 = vlaneseq
    %v353 = vshrl.u32 %v352, 7
    %v354 = vsub.s32 5, %v353
    %v355 = vrot.slane %v345, %v354
    %v356 = vadd.f32 %v350, %v355
    %v357 = vadd.f32 %v351, %v355
    %v358 = vpack.c.bf16 %v357, %v356
    %s359 = scalar_lea.vmem [#allocation2], 128
    %v360 = vld [vmem:[%s359] sm:$0xf]
    %v361 = vld [vmem:[%s359 + $0x4] sm:$0xf]
    %v362 = vld [vmem:[%s359 + $0x8] sm:$0xf]
    %v363 = vld [vmem:[%s359 + $0xc] sm:$0xf]
    %v364 = vld [vmem:[%s359 + $0x10] sm:$0xf]
    %v365 = vld [vmem:[%s359 + $0x14] sm:$0xf]
    %v366 = vld [vmem:[%s359 + $0x18] sm:$0xf]
    %v367 = vld [vmem:[%s359 + $0x1c] sm:$0xf]
    %v368 = vld [vmem:[%s359 + $0x20] sm:$0xf]
    %v369 = vld [vmem:[%s359 + $0x24] sm:$0xf]
    %v370 = vld [vmem:[%s359 + $0x28] sm:$0xf]
    %v371 = vld [vmem:[%s359 + $0x2c] sm:$0xf]
    %v372 = vld [vmem:[%s359 + $0x30] sm:$0xf]
    %v373 = vld [vmem:[%s359 + $0x34] sm:$0xf]
    %v374 = vld [vmem:[%s359 + $0x38] sm:$0xf]
    %v375 = vld [vmem:[%s359 + $0x3c] sm:$0xf]
    %v376 = vlaneseq
    %v377 = vshrl.u32 %v376, 7
    %v378 = vsub.s32 6, %v377
    %v379 = vrot.slane %v29, %v378
    %v396 = vunpack.c.l.b16 %v360
    %v397 = vunpack.c.l.b16 %v361
    %v398 = vunpack.c.l.b16 %v362
    %v399 = vunpack.c.l.b16 %v363
    %v400 = vunpack.c.l.b16 %v364
    %v401 = vunpack.c.l.b16 %v365
    %v402 = vunpack.c.l.b16 %v366
    %v403 = vunpack.c.l.b16 %v367
    %v404 = vunpack.c.l.b16 %v368
    %v405 = vunpack.c.l.b16 %v369
    %v406 = vunpack.c.l.b16 %v370
    %v407 = vunpack.c.l.b16 %v371
    %v408 = vunpack.c.l.b16 %v372
    %v409 = vunpack.c.l.b16 %v373
    %v410 = vunpack.c.l.b16 %v374
    %v411 = vunpack.c.l.b16 %v375
    %v412 = vpack.c.b16 %v397, %v396
    %v413 = vpack.c.b16 %v399, %v398
    %v414 = vpack.c.b16 %v401, %v400
    %v415 = vpack.c.b16 %v403, %v402
    %v416 = vpack.c.b16 %v405, %v404
    %v417 = vpack.c.b16 %v407, %v406
    %v418 = vpack.c.b16 %v409, %v408
    %v419 = vpack.c.b16 %v411, %v410
    %428 = vmatprep.subr.bf16.mxu0 0
    %429 = vmatpush1.bf16.msra.mxu0 %v419
    %430 = vmatprep.subr.bf16.mxu0 0
    %431 = vmatpush1.bf16.msra.mxu0 %v418
    %432 = vmatprep.subr.bf16.mxu0 0
    %433 = vmatpush1.bf16.msra.mxu0 %v417
    %434 = vmatprep.subr.bf16.mxu0 0
    %435 = vmatpush1.bf16.msra.mxu0 %v416
    %436 = vmatprep.subr.bf16.mxu0 0
    %437 = vmatpush1.bf16.msra.mxu0 %v415
    %438 = vmatprep.subr.bf16.mxu0 0
    %439 = vmatpush1.bf16.msra.mxu0 %v414
    %440 = vmatprep.subr.bf16.mxu0 0
    %441 = vmatpush1.bf16.msra.mxu0 %v413
    %442 = vmatprep.subr.bf16.mxu0 0
    %443 = vmatpush1.bf16.msra.mxu0 %v412
    %444 = vmatprep.subr.bf16.mxu0 0
    %445 = vmatpush2.bf16.msra.mxu0 0
    %446 = vmatprep.subr.bf16.mxu0 0
    %447 = vmatpush2.bf16.msra.mxu0 0
    %448 = vmatprep.subr.bf16.mxu0 0
    %449 = vmatpush2.bf16.msra.mxu0 0
    %450 = vmatprep.subr.bf16.mxu0 0
    %451 = vmatpush2.bf16.msra.mxu0 0
    %452 = vmatprep.subr.bf16.mxu0 0
    %453 = vmatpush2.bf16.msra.mxu0 0
    %454 = vmatprep.subr.bf16.mxu0 0
    %455 = vmatpush2.bf16.msra.mxu0 0
    %456 = vmatprep.subr.bf16.mxu0 0
    %457 = vmatpush2.bf16.msra.mxu0 0
    %458 = vmatprep.subr.bf16.mxu0 0
    %459 = vmatpush2.bf16.msra.mxu0 0
    %460 = vmatprep.mubr.bf16.mxu0 0
    %461 = vmatmul.mubr.bf16.gmra.mxu0 %v358
    %v462 = vpop.f32.mrf.mxu0
    %v463 = vadd.f32 %v379, %v462
    %v464 = vpop.f32.mrf.mxu0
    %v465 = vpop.f32.mrf.mxu0
    %v466 = vadd.f32 %v379, %v465
    %v467 = vpop.f32.mrf.mxu0
    %468 = vdwg.mxu0
    %v469 = vmax.f32 %v463, 0.0
    %v470 = vmax.f32 %v466, 0.0
    %v471 = vmul.f32 %v469, %v38
    %v472 = vmul.f32 %v470, %v39
    %v473 = vadd.f32 %v471, %v472
    %v474 = vrot.slane %v473, 4
    %v475 = vadd.f32 %v473, %v474
    %v476 = vrot.slane %v475, 2
    %v477 = vadd.f32 %v475, %v476
    %v478 = vrot.slane %v477, 1
    %v479 = vadd.f32 %v477, %v478
    %v480 = vmul.f32 %v471, %v471
    %v481 = vmul.f32 %v472, %v472
    %v482 = vadd.f32 %v480, %v481
    %v483 = vrot.slane %v482, 4
    %v484 = vadd.f32 %v482, %v483
    %v485 = vrot.slane %v484, 2
    %v486 = vadd.f32 %v484, %v485
    %v487 = vrot.slane %v486, 1
    %v488 = vadd.f32 %v486, %v487
    %v489 = vmul.f32 %v479, 0.125
    %v490 = vmul.f32 %v488, 0.125
    %v491 = vmul.f32 %v489, %v489
    %v492 = vsub.f32 %v490, %v491
    %v493 = vmax.f32 %v492, 0.0
    %v494 = vadd.f32 %v493, 1e-05
    %v495 = vrsqrt.pop %v494
    %v496 = vmul.f32 %v29, %v495
    %v497 = vmul.f32 %v489, %v496
    %v499 = vrot.slane %v497, 7
    %v501 = vsub.f32 %v30, %v499
    %v502 = vlaneseq
    %v503 = vshrl.u32 %v502, 7
    %v504 = vsub.s32 7, %v503
    %v505 = vrot.slane %v496, %v504
    %v506 = vmul.f32 %v469, %v505
    %v507 = vmul.f32 %v470, %v505
    %v508 = vlaneseq
    %v509 = vshrl.u32 %v508, 7
    %v510 = vsub.s32 0, %v509
    %v511 = vrot.slane %v501, %v510
    %v512 = vadd.f32 %v506, %v511
    %v513 = vadd.f32 %v507, %v511
    %v514 = vpack.c.bf16 %v513, %v512
    %s515 = scalar_lea.vmem [#allocation2], 192
    %v516 = vld [vmem:[%s515] sm:$0xf]
    %v517 = vld [vmem:[%s515 + $0x4] sm:$0xf]
    %v518 = vld [vmem:[%s515 + $0x8] sm:$0xf]
    %v519 = vld [vmem:[%s515 + $0xc] sm:$0xf]
    %v520 = vld [vmem:[%s515 + $0x10] sm:$0xf]
    %v521 = vld [vmem:[%s515 + $0x14] sm:$0xf]
    %v522 = vld [vmem:[%s515 + $0x18] sm:$0xf]
    %v523 = vld [vmem:[%s515 + $0x1c] sm:$0xf]
    %v524 = vld [vmem:[%s515 + $0x20] sm:$0xf]
    %v525 = vld [vmem:[%s515 + $0x24] sm:$0xf]
    %v526 = vld [vmem:[%s515 + $0x28] sm:$0xf]
    %v527 = vld [vmem:[%s515 + $0x2c] sm:$0xf]
    %v528 = vld [vmem:[%s515 + $0x30] sm:$0xf]
    %v529 = vld [vmem:[%s515 + $0x34] sm:$0xf]
    %v530 = vld [vmem:[%s515 + $0x38] sm:$0xf]
    %v531 = vld [vmem:[%s515 + $0x3c] sm:$0xf]
    %v532 = vlaneseq
    %v533 = vshrl.u32 %v532, 7
    %v534 = vsub.s32 1, %v533
    %v535 = vrot.slane %v30, %v534
    %v552 = vunpack.c.l.b16 %v516
    %v553 = vunpack.c.l.b16 %v517
    %v554 = vunpack.c.l.b16 %v518
    %v555 = vunpack.c.l.b16 %v519
    %v556 = vunpack.c.l.b16 %v520
    %v557 = vunpack.c.l.b16 %v521
    %v558 = vunpack.c.l.b16 %v522
    %v559 = vunpack.c.l.b16 %v523
    %v560 = vunpack.c.l.b16 %v524
    %v561 = vunpack.c.l.b16 %v525
    %v562 = vunpack.c.l.b16 %v526
    %v563 = vunpack.c.l.b16 %v527
    %v564 = vunpack.c.l.b16 %v528
    %v565 = vunpack.c.l.b16 %v529
    %v566 = vunpack.c.l.b16 %v530
    %v567 = vunpack.c.l.b16 %v531
    %v568 = vpack.c.b16 %v553, %v552
    %v569 = vpack.c.b16 %v555, %v554
    %v570 = vpack.c.b16 %v557, %v556
    %v571 = vpack.c.b16 %v559, %v558
    %v572 = vpack.c.b16 %v561, %v560
    %v573 = vpack.c.b16 %v563, %v562
    %v574 = vpack.c.b16 %v565, %v564
    %v575 = vpack.c.b16 %v567, %v566
    %584 = vmatprep.subr.bf16.mxu0 0
    %585 = vmatpush1.bf16.msra.mxu0 %v575
    %586 = vmatprep.subr.bf16.mxu0 0
    %587 = vmatpush1.bf16.msra.mxu0 %v574
    %588 = vmatprep.subr.bf16.mxu0 0
    %589 = vmatpush1.bf16.msra.mxu0 %v573
    %590 = vmatprep.subr.bf16.mxu0 0
    %591 = vmatpush1.bf16.msra.mxu0 %v572
    %592 = vmatprep.subr.bf16.mxu0 0
    %593 = vmatpush1.bf16.msra.mxu0 %v571
    %594 = vmatprep.subr.bf16.mxu0 0
    %595 = vmatpush1.bf16.msra.mxu0 %v570
    %596 = vmatprep.subr.bf16.mxu0 0
    %597 = vmatpush1.bf16.msra.mxu0 %v569
    %598 = vmatprep.subr.bf16.mxu0 0
    %599 = vmatpush1.bf16.msra.mxu0 %v568
    %600 = vmatprep.subr.bf16.mxu0 0
    %601 = vmatpush2.bf16.msra.mxu0 0
    %602 = vmatprep.subr.bf16.mxu0 0
    %603 = vmatpush2.bf16.msra.mxu0 0
    %604 = vmatprep.subr.bf16.mxu0 0
    %605 = vmatpush2.bf16.msra.mxu0 0
    %606 = vmatprep.subr.bf16.mxu0 0
    %607 = vmatpush2.bf16.msra.mxu0 0
    %608 = vmatprep.subr.bf16.mxu0 0
    %609 = vmatpush2.bf16.msra.mxu0 0
    %610 = vmatprep.subr.bf16.mxu0 0
    %611 = vmatpush2.bf16.msra.mxu0 0
    %612 = vmatprep.subr.bf16.mxu0 0
    %613 = vmatpush2.bf16.msra.mxu0 0
    %614 = vmatprep.subr.bf16.mxu0 0
    %615 = vmatpush2.bf16.msra.mxu0 0
    %616 = vmatprep.mubr.bf16.mxu0 0
    %617 = vmatmul.mubr.bf16.gmra.mxu0 %v514
    %v618 = vpop.f32.mrf.mxu0
    %v619 = vadd.f32 %v535, %v618
    %v620 = vpop.f32.mrf.mxu0
    %v621 = vpop.f32.mrf.mxu0
    %v622 = vadd.f32 %v535, %v621
    %v623 = vpop.f32.mrf.mxu0
    %624 = vdwg.mxu0
    %625 = vst [vmem:[%s3] sm:$0xff] %v619
    %626 = vst [vmem:[%s3 + $0x8] sm:$0xff] %v622
    // Predicated region
    $region18: #{custom_mlp_forward.1} parent=1 // pred_check
      _
    $region19: #{custom_mlp_forward.1} parent=1 // pred_check_branch
      %628 = sbr.rel (0) target = $region21
    $region20: #{custom_mlp_forward.1} parent=1 // pred_region
      _
    $region21: #{custom_mlp_forward.1} parent=1 // pred_fallthru
      _
    // Predicated region
    $region22: #{custom_mlp_forward.1} parent=1 // pred_check
      _
    $region23: #{custom_mlp_forward.1} parent=1 // pred_check_branch
      %630 = sbr.rel (0) target = $region25
    $region24: #{custom_mlp_forward.1} parent=1 // pred_region
      _
    $region25: #{custom_mlp_forward.1} parent=1 // pred_fallthru
      _
    %631 = vsyncpa [#allocation3], 1

</llo_original>
